<compile_context>
chip_gen: v5e
topology: v5e:2x2
jax: 0.10.0
libtpu: 0.0.40
codegen_flags: <defaults>
</compile_context>

<pallas_src>
import functools

import jax
import jax.numpy as jnp
from jax.experimental import pallas as pl
from jax.experimental.pallas import tpu as pltpu

K = 2                                # TAGConv hop count (module: k=2)
OUT_LANE_PAD = 128                   # lane-dense width for the classifier output
VMEM_LIMIT_BYTES = 48 * 1024 * 1024  # headroom under v7x's 64 MiB physical VMEM


# --------------------------------------------------------------------------- kernels
def _propagate_kernel(a_ref, h_ref, out_ref):
    """One hop of pre-normalized propagation: out[i, :] = sum_k A_hat[i, k] @ h[k, :]."""
    k = pl.program_id(1)

    @pl.when(k == 0)
    def _():
        out_ref[...] = jnp.zeros_like(out_ref)

    out_ref[...] += jnp.dot(a_ref[...], h_ref[...].astype(jnp.bfloat16),
                            preferred_element_type=jnp.float32)


def _propagate_project_kernel(a_ref, p1c_ref, p0_ref, p1_ref, w_ref, b_ref,
                              out_ref, acc_ref, *, apply_relu):
    """Second hop (p2 = A_hat @ p1) fused with the TAGConv projection:
       out = act([p0 | p1 | p2] @ W + b) for one row tile (epilogue at last k)."""
    k = pl.program_id(1)

    @pl.when(k == 0)
    def _():
        acc_ref[...] = jnp.zeros_like(acc_ref)

    acc_ref[...] += jnp.dot(a_ref[...], p1c_ref[...].astype(jnp.bfloat16),
                            preferred_element_type=jnp.float32)

    @pl.when(k == pl.num_programs(1) - 1)
    def _():
        hops = jnp.concatenate([p0_ref[...], p1_ref[...], acc_ref[...]], axis=-1)
        y = jnp.dot(hops, w_ref[...], preferred_element_type=jnp.float32)
        y = y + b_ref[...]
        if apply_relu:
            y = jnp.maximum(y, 0.0)
        out_ref[...] = y


# --------------------------------------------------------------------------- wrappers
def _pick_tile(n, preferred=128):
    for t in (preferred, 512, 256, 128, 64, 32, 16, 8):
        if t <= n and n % t == 0:
            return t
    return n


def _fold_norm(A, norm):
    """A_hat = D^-1/2 A D^-1/2 folded once in f32, then cast to bf16."""
    n = A.shape[0]
    a_hat = norm.reshape(n, 1) * A.astype(jnp.float32) * norm.reshape(1, n)
    return a_hat.astype(jnp.bfloat16)


def _propagate(a_hat, h, *, tm, tk):
    n = a_hat.shape[0]
    f = h.shape[1]
    return pl.pallas_call(
        _propagate_kernel,
        out_shape=jax.ShapeDtypeStruct((n, f), jnp.float32),
        grid_spec=pltpu.PrefetchScalarGridSpec(
            num_scalar_prefetch=0,
            grid=(n // tm, n // tk),
            in_specs=[
                pl.BlockSpec((tm, tk), lambda i, k: (i, k)),   # A_hat tile (streamed)
                pl.BlockSpec((tk, f), lambda i, k: (k, 0)),    # hop input, reduction block
            ],
            out_specs=pl.BlockSpec((tm, f), lambda i, k: (i, 0)),
        ),
        compiler_params=pltpu.CompilerParams(
            dimension_semantics=("parallel", "arbitrary"),
            vmem_limit_bytes=VMEM_LIMIT_BYTES),
    )(a_hat, h)


def _propagate_project(a_hat, p0, p1, w, b, *, apply_relu, tm, tk):
    n = a_hat.shape[0]
    f = p0.shape[1]
    out = w.shape[1]
    kernel = functools.partial(_propagate_project_kernel, apply_relu=apply_relu)
    return pl.pallas_call(
        kernel,
        out_shape=jax.ShapeDtypeStruct((n, out), jnp.float32),
        grid_spec=pltpu.PrefetchScalarGridSpec(
            num_scalar_prefetch=0,
            grid=(n // tm, n // tk),
            in_specs=[
                pl.BlockSpec((tm, tk), lambda i, k: (i, k)),            # A_hat tile (streamed)
                pl.BlockSpec((tk, f), lambda i, k: (k, 0)),             # p1 reduction block
                pl.BlockSpec((tm, f), lambda i, k: (i, 0)),             # p0 row block (epilogue)
                pl.BlockSpec((tm, f), lambda i, k: (i, 0)),             # p1 row block (epilogue)
                pl.BlockSpec(((K + 1) * f, out), lambda i, k: (0, 0)),  # W resident
                pl.BlockSpec((1, out), lambda i, k: (0, 0)),            # b resident
            ],
            out_specs=pl.BlockSpec((tm, out), lambda i, k: (i, 0)),
            scratch_shapes=[pltpu.VMEM((tm, f), jnp.float32)],
        ),
        compiler_params=pltpu.CompilerParams(
            dimension_semantics=("parallel", "arbitrary"),
            vmem_limit_bytes=VMEM_LIMIT_BYTES),
    )(a_hat, p1, p0, p1, w, b)


def tag_node_classifier_forward(A, norm, X, W1, b1, W2, b2, *, tm=128, tk=128):
    n = X.shape[0]
    n_classes = W2.shape[1]

    a_hat = _fold_norm(A, norm)
    tm = _pick_tile(n, tm)
    tk = _pick_tile(n, tk)

    # Pad the classifier head to a lane-dense 128 output width (unmasked stores).
    out_pad = max(OUT_LANE_PAD, n_classes)
    W2p = jnp.zeros((W2.shape[0], out_pad), jnp.float32).at[:, :n_classes].set(W2)
    b2p = jnp.zeros((1, out_pad), jnp.float32).at[:, :n_classes].set(b2)

    x = X.astype(jnp.float32)

    # ---- layer 0: TAGConv(in_feats -> n_hidden), ReLU activation ----
    x1 = _propagate(a_hat, x, tm=tm, tk=tk)                              # A_hat X
    h = _propagate_project(a_hat, x, x1, W1.astype(jnp.float32),
                           b1.astype(jnp.float32), apply_relu=True,
                           tm=tm, tk=tk)                                 # relu([X|AX|A^2X] W1 + b1)
    # dropout between layers: identity at inference

    # ---- layer 1: TAGConv(n_hidden -> n_classes), no activation ----
    g1 = _propagate(a_hat, h, tm=tm, tk=tk)                              # A_hat H
    logits_pad = _propagate_project(a_hat, h, g1, W2p, b2p,
                                    apply_relu=False, tm=tm, tk=tk)
    return logits_pad[:, :n_classes]


# --------------------------------------------------------------------------- references
def reference_forward(A, norm, X, W1, b1, W2, b2):
    """Pure-JAX f32 reference of the same math (highest matmul precision)."""
    hi = jax.lax.Precision.HIGHEST

    def tagconv(h, W, b, relu):
        hops = [h]
        for _ in range(K):
            hops.append(norm * jnp.dot(A, norm * hops[-1], precision=hi))
        out = jnp.dot(jnp.concatenate(hops, axis=-1), W, precision=hi) + b
        return jnp.maximum(out, 0.0) if relu else out

    h = tagconv(X, W1, b1, relu=True)
    return tagconv(h, W2, b2, relu=False)


def reference_forward_matched(A, norm, X, W1, b1, W2, b2):
    """Reference mirroring the kernel's bf16 A_hat / bf16 hop-input quantization."""
    a_hat = _fold_norm(A, norm)

    def prop(h):
        return jnp.dot(a_hat, h.astype(jnp.bfloat16),
                       preferred_element_type=jnp.float32)

    def tagconv(h, W, b, relu):
        h1 = prop(h)
        h2 = prop(h1)
        out = jnp.dot(jnp.concatenate([h, h1, h2], axis=-1), W,
                      precision=jax.lax.Precision.HIGHEST) + b
        return jnp.maximum(out, 0.0) if relu else out

    h = tagconv(X, W1, b1, relu=True)
    return tagconv(h, W2, b2, relu=False)


# --------------------------------------------------------------------------- demo
if __name__ == "__main__":
    N = 256            # nodes (2x2 grid of 128-tiles -> exercises the pipeline)
    in_feats = 16
    n_hidden = 16      # module default n_hidden=16
    n_classes = 4
    dtype = jnp.float32

    key = jax.random.PRNGKey(0)
    k_adj, k_x, k_w1, k_b1, k_w2, k_b2 = jax.random.split(key, 6)

    # Random symmetric 0/1 adjacency, no self loops.
    upper = (jax.random.uniform(k_adj, (N, N)) < 0.05).astype(dtype)
    upper = jnp.triu(upper, k=1)
    A = upper + upper.T

    # DGL TAGConv normalization: clamp(in_degree, min=1) ** -0.5
    deg = jnp.sum(A, axis=1)
    norm = jnp.power(jnp.maximum(deg, 1.0), -0.5).reshape(N, 1).astype(dtype)

    X = jax.random.normal(k_x, (N, in_feats), dtype)

    # TAGConv linear weights: ((k+1)*in, out), bias (1, out).
    W1 = jax.random.normal(k_w1, ((K + 1) * in_feats, n_hidden), dtype) * 0.1
    b1 = jax.random.normal(k_b1, (1, n_hidden), dtype) * 0.1
    W2 = jax.random.normal(k_w2, ((K + 1) * n_hidden, n_classes), dtype) * 0.1
    b2 = jax.random.normal(k_b2, (1, n_classes), dtype) * 0.1

    logits = tag_node_classifier_forward(A, norm, X, W1, b1, W2, b2)
    logits = jax.block_until_ready(logits)
    assert logits.shape == (N, n_classes)

    # Tight check against a reference that mirrors the kernel's bf16 quantization.
    ref_q = reference_forward_matched(A, norm, X, W1, b1, W2, b2)
    assert jnp.allclose(logits, ref_q, atol=1e-2, rtol=1e-2), \
        float(jnp.max(jnp.abs(logits - ref_q)))

    # Loose check against exact f32 math (bf16 adjacency => relaxed tolerance).
    ref = reference_forward(A, norm, X, W1, b1, W2, b2)
    assert jnp.allclose(logits, ref, atol=5e-2, rtol=5e-2), \
        float(jnp.max(jnp.abs(logits - ref)))

    print("KERNEL_OK")
</pallas_src>

<mosaic_0001>
module attributes {stable_mosaic.version = 11 : i64} {
  func.func @_propagate_kernel(%arg0: i32, %arg1: i32, %arg2: memref<128x128xbf16, #tpu.memory_space<vmem>>, %arg3: memref<128x16xf32, #tpu.memory_space<vmem>>, %arg4: memref<128x16xf32, #tpu.memory_space<vmem>>) attributes {dimension_semantics = [#tpu.dimension_semantics<parallel>, #tpu.dimension_semantics<arbitrary>], iteration_bounds = array<i64: 2, 2>, scalar_prefetch = 0 : i64, scratch_operands = 0 : i64, tpu.core_type = #tpu.core_type<tc>, window_params = [{transform_indices = @transform_0, window_bounds = array<i64: 128, 128>}, {transform_indices = @transform_1, window_bounds = array<i64: 128, 16>}, {transform_indices = @transform_2, window_bounds = array<i64: 128, 16>}]} {
    %c0_i32 = arith.constant 0 : i32
    %0 = arith.cmpi eq, %arg1, %c0_i32 : i32
    %1 = arith.extui %0 : i1 to i32
    %c0_i32_0 = arith.constant 0 : i32
    %2 = arith.cmpi ne, %1, %c0_i32_0 : i32
    scf.if %2 {
      %cst_8 = arith.constant 0.000000e+00 : f32
      %10 = vector.broadcast %cst_8 : f32 to vector<128x16xf32>
      %c0_9 = arith.constant 0 : index
      %c0_10 = arith.constant 0 : index
      %11 = vector.load %arg4[%c0_9, %c0_10] : memref<128x16xf32, #tpu.memory_space<vmem>>, vector<128x16xf32>
      tpu.vector_store %arg4[%c0_9, %c0_10], %10 {strides = array<i32>} : memref<128x16xf32, #tpu.memory_space<vmem>>, vector<128x16xf32>,
    } else {
    }
    %c0 = arith.constant 0 : index
    %c0_1 = arith.constant 0 : index
    %3 = vector.load %arg4[%c0, %c0_1] : memref<128x16xf32, #tpu.memory_space<vmem>>, vector<128x16xf32>
    %c0_2 = arith.constant 0 : index
    %c0_3 = arith.constant 0 : index
    %4 = vector.load %arg2[%c0_2, %c0_3] : memref<128x128xbf16, #tpu.memory_space<vmem>>, vector<128x128xbf16>
    %c0_4 = arith.constant 0 : index
    %c0_5 = arith.constant 0 : index
    %5 = vector.load %arg3[%c0_4, %c0_5] : memref<128x16xf32, #tpu.memory_space<vmem>>, vector<128x16xf32>
    %6 = arith.truncf %5 : vector<128x16xf32> to vector<128x16xbf16>
    %cst = arith.constant dense<0.000000e+00> : vector<128x16xf32>
    %7 = tpu.matmul %4, %6, %cst {dimension_numbers = #tpu.dot_dimension_numbers<[1], [0], [0], [1], [0, 0, 1, 1], [], []>} : vector<128x128xbf16>, vector<128x16xbf16>, vector<128x16xf32> -> vector<128x16xf32>
    %8 = arith.addf %3, %7 : vector<128x16xf32>
    %c0_6 = arith.constant 0 : index
    %c0_7 = arith.constant 0 : index
    %9 = vector.load %arg4[%c0_6, %c0_7] : memref<128x16xf32, #tpu.memory_space<vmem>>, vector<128x16xf32>
    tpu.vector_store %arg4[%c0_6, %c0_7], %8 {strides = array<i32>} : memref<128x16xf32, #tpu.memory_space<vmem>>, vector<128x16xf32>,
    return
  }
  func.func @transform_0(%arg0: i32, %arg1: i32) -> (i32, i32) {
    %c0_i32 = arith.constant 0 : i32
    return %arg0, %arg1 : i32, i32
  }
  func.func @transform_1(%arg0: i32, %arg1: i32) -> (i32, i32) {
    %c0_i32 = arith.constant 0 : i32
    %c0_i32_0 = arith.constant 0 : i32
    return %arg1, %c0_i32 : i32, i32
  }
  func.func @transform_2(%arg0: i32, %arg1: i32) -> (i32, i32) {
    %c0_i32 = arith.constant 0 : i32
    %c0_i32_0 = arith.constant 0 : i32
    return %arg0, %c0_i32 : i32, i32
  }
}

</mosaic_0001>

<llo_original>
// kernel: tpu_custom_call.1
$region0: #{tpu_custom_call.1}
  #allocation0 [shape = 'u32[]', space=smem, size = 0x4, offset = 0x4, fixed_abs, tag = 'smem constant byte address 0x4 - core index']
  #allocation1 [shape = 'u32[72,128]{1,0:T(1,128)}', space=vmem, size = 0x9000, scoped, tag = 'internal scratch']
  %s0 = inlined_call_operand.vmem [shape: bf16[256,256], index: 0, kind: input, shape index: {}]
  %s1 = inlined_call_operand.vmem [shape: f32[256,16], index: 1, kind: input, shape index: {}]
  %s2 = inlined_call_operand.vmem [shape: f32[256,16], index: 2, kind: output, shape index: {}]
  %s3 = sld [smem:[#allocation0]]
  $region86: #{tpu_custom_call.1} parent=0
    _
  %s5 = ssub.s32 1, %s3
  %s6 = scalar_select 0, %s5, %s3
  $region1: #{tpu_custom_call.1} parent=0
    #allocation2 [shape = 'u8[65536]{0}', space=vmem, size = 0x10000, scoped, tag = 'input window, operand 0']
    loop: start=0, step=1, limit=6
    $region2: #{tpu_custom_call.1} parent=1 // loop_pre_header
      _
    $region3: #{tpu_custom_call.1} parent=1 // loop_header
      %s8 = sphi 0, %s12
      %p9 = scmp.ge.s32.totalorder %s8, 6
      %s15 = sphi 0, %s27
      %s16 = sphi 0, %s23
      %s17 = sphi 0, %s15
      %s18 = sphi 0, %s16
      %s19 = sphi 0, %s17
      %s20 = sphi 0, %s18
      %s32 = sphi 0, %s34
      %s35 = sphi 0, %s32
      %s36 = sphi 0, %s35
      %s52 = sphi 0, %s36
      %s58 = sphi 0, %s60
      %s61 = sphi 0, %s58
      %s62 = sphi 0, %s61
      %s78 = sphi 0, %s62
      %s84 = sphi 0, %s86
      %s87 = sphi 0, %s84
      %s88 = sphi 0, %s87
      %s104 = sphi 0, %s88
    $region4: #{tpu_custom_call.1} parent=1 // loop_header_branch
      %11 = sbr.rel (%p9) target = $region8
    $region5: #{tpu_custom_call.1} parent=1 // loop_body
      %s13 = ssub.s32 %s8, 1
      %s14 = ssub.s32 %s8, 2
      %s21 = sadd.s32 1, %s16
      %p22 = scmp.ge.s32.totalorder %s21, 2
      %s23 = scalar_select %p22, 0, %s21
      %s24 = sadd.s32 1, %s15
      %s25 = scalar_select %p22, %s24, %s15
      %p26 = scmp.ge.s32.totalorder %s25, 2
      %s27 = scalar_select %p26, 0, %s25
      %s28 = ssub.s32 %s15, %s27
      %s29 = ssub.s32 %s16, %s23
      %s30 = sor.u32 %s28, %s29
      %p31 = scmp.eq.s32.totalorder %s30, 0
      %s33 = sadd.s32 %s32, 1
      %s34 = scalar_select %p31, %s32, %s33
      %p37 = pneg %p31
      %p38 = scmp.eq.s32.totalorder %s8, 3
      %p39 = por %p37, %p38
      %p40 = scmp.ne.s32.totalorder %s32, %s35
      %p41 = scmp.eq.s32.totalorder %s8, 0
      %p42 = por %p40, %p41
      %p43 = scmp.ne.s32.totalorder %s32, %s35
      %p44 = scmp.eq.s32.totalorder %s13, 3
      %p45 = por %p43, %p44
      %p46 = scmp.ne.s32.totalorder %s35, %s36
      %p47 = scmp.eq.s32.totalorder %s13, 0
      %p48 = por %p46, %p47
      %p49 = scmp.ne.s32.totalorder %s35, %s36
      %p50 = scmp.eq.s32.totalorder %s14, 3
      %p51 = por %p49, %p50
      %p53 = scmp.ne.s32.totalorder %s36, %s52
      %p54 = scmp.eq.s32.totalorder %s14, 0
      %p55 = por %p53, %p54
      %s56 = ssub.s32 %s16, %s23
      %p57 = scmp.eq.s32.totalorder %s56, 0
      %s59 = sadd.s32 %s58, 1
      %s60 = scalar_select %p57, %s58, %s59
      %p63 = pneg %p57
      %p64 = scmp.eq.s32.totalorder %s8, 3
      %p65 = por %p63, %p64
      %p66 = scmp.ne.s32.totalorder %s58, %s61
      %p67 = scmp.eq.s32.totalorder %s8, 0
      %p68 = por %p66, %p67
      %p69 = scmp.ne.s32.totalorder %s58, %s61
      %p70 = scmp.eq.s32.totalorder %s13, 3
      %p71 = por %p69, %p70
      %p72 = scmp.ne.s32.totalorder %s61, %s62
      %p73 = scmp.eq.s32.totalorder %s13, 0
      %p74 = por %p72, %p73
      %p75 = scmp.ne.s32.totalorder %s61, %s62
      %p76 = scmp.eq.s32.totalorder %s14, 3
      %p77 = por %p75, %p76
      %p79 = scmp.ne.s32.totalorder %s62, %s78
      %p80 = scmp.eq.s32.totalorder %s14, 0
      %p81 = por %p79, %p80
      %s82 = ssub.s32 %s15, %s27
      %p83 = scmp.eq.s32.totalorder %s82, 0
      %s85 = sadd.s32 %s84, 1
      %s86 = scalar_select %p83, %s84, %s85
      %p89 = pneg %p83
      %p90 = scmp.eq.s32.totalorder %s8, 3
      %p91 = por %p89, %p90
      %p92 = scmp.ne.s32.totalorder %s84, %s87
      %p93 = scmp.eq.s32.totalorder %s8, 0
      %p94 = por %p92, %p93
      %p95 = scmp.ne.s32.totalorder %s84, %s87
      %p96 = scmp.eq.s32.totalorder %s13, 3
      %p97 = por %p95, %p96
      %p98 = scmp.ne.s32.totalorder %s87, %s88
      %p99 = scmp.eq.s32.totalorder %s13, 0
      %p100 = por %p98, %p99
      %p101 = scmp.ne.s32.totalorder %s87, %s88
      %p102 = scmp.eq.s32.totalorder %s14, 3
      %p103 = por %p101, %p102
      %p105 = scmp.ne.s32.totalorder %s88, %s104
      %p106 = scmp.eq.s32.totalorder %s14, 0
      %p107 = por %p105, %p106
      %p108 = scmp.le.s32.totalorder 1, %s8
      %p109 = scmp.lt.s32.totalorder %s8, 5
      %p110 = pnand %p108, %p109
      %p111 = pneg %p110
      // Predicated region
      $region9: #{tpu_custom_call.1} parent=5 // pred_check
        _
      $region10: #{tpu_custom_call.1} parent=5 // pred_check_branch
        %113 = sbr.rel (%p110) target = $region12
      $region11: #{tpu_custom_call.1} parent=5 // pred_region
        %s114 = ssub.s32 %s8, 1
      $region12: #{tpu_custom_call.1} parent=5 // pred_fallthru
        _
      %p115 = scmp.lt.s32.totalorder %s8, 4
      // Predicated region
      $region13: #{tpu_custom_call.1} parent=5 // pred_check
        %p116 = pneg %p115
      $region14: #{tpu_custom_call.1} parent=5 // pred_check_branch
        %118 = sbr.rel (%p116) target = $region16
      $region15: #{tpu_custom_call.1} parent=5 // pred_region
        // Predicated region
        $region17: #{tpu_custom_call.1} parent=15 // pred_check
          %p119 = pneg %p42
        $region18: #{tpu_custom_call.1} parent=15 // pred_check_branch
          %121 = sbr.rel (%p119) target = $region20
        $region19: #{tpu_custom_call.1} parent=15 // pred_region
          %s122 = sand.u32 %s32, 1
          %s123 = sand.u32 %s32, 1
          %s124 = smul.addr %s123, 64
          %s125 = scalar_lea.vmem [#allocation2], %s124
          %s126 = smul.u32 16, %s15
          %s127 = smul.addr %s126, 2
          %s128 = sadd.s32 %s16, %s127
          %s129 = smul.addr %s128, 4
          %s130 = scalar_lea.vmem %s0, %s129
          // Predicated region
          $region21: #{tpu_custom_call.1} parent=19 // pred_check
            _
          $region22: #{tpu_custom_call.1} parent=19 // pred_check_branch
            %132 = sbr.rel (0) target = $region24
          $region23: #{tpu_custom_call.1} parent=19 // pred_region
            // Predicated region
            $region25: #{tpu_custom_call.1} parent=23 // pred_check
              _
            $region26: #{tpu_custom_call.1} parent=23 // pred_check_branch
              %134 = sbr.rel target = $region28
            $region27: #{tpu_custom_call.1} parent=23 // pred_region
              // Predicated region
              $region40: #{tpu_custom_call.1} parent=27 // pred_check
                _
              $region41: #{tpu_custom_call.1} parent=27 // pred_check_branch
                %180 = sbr.rel (0) target = $region43
              $region42: #{tpu_custom_call.1} parent=27 // pred_region
                loop: start=0, step=1, limit=1
                $region44: #{tpu_custom_call.1} parent=42 // loop_pre_header
                  _
                $region45: #{tpu_custom_call.1} parent=42 // loop_header
                  %s182 = sphi 0, %s186
                  %p183 = scmp.ge.s32.totalorder %s182, 1
                  %s187 = sphi %s130, %s130
                  %s188 = sphi %s125, %s125
                $region46: #{tpu_custom_call.1} parent=42 // loop_header_branch
                  %185 = sbr.rel (%p183) target = $region50
                $region47: #{tpu_custom_call.1} parent=42 // loop_body
                  _
                $region48: #{tpu_custom_call.1} parent=42 // loop_footer
                  %s186 = sadd.s32 1, %s182
                $region49: #{tpu_custom_call.1} parent=42 // loop_footer_branch
                  %181 = sbr.rel target = $region45
                $region50: #{tpu_custom_call.1} parent=42 // loop_exit
                  _
                %s190 = ssub.s32 16, 1
                loop: start=0, step=1, limit=1
                $region51: #{tpu_custom_call.1} parent=42 // loop_pre_header
                  _
                $region52: #{tpu_custom_call.1} parent=42 // loop_header
                  %s192 = sphi 0, %s196
                  %p193 = scmp.ge.s32.totalorder %s192, 1
                  %s197 = sphi %s130, %s130
                  %s198 = sphi %s125, %s125
                $region53: #{tpu_custom_call.1} parent=42 // loop_header_branch
                  %195 = sbr.rel (%p193) target = $region57
                $region54: #{tpu_custom_call.1} parent=42 // loop_body
                  %v199 = vld [vmem:[%s197] sm:%s190]
                  %200 = vst [vmem:[%s198] sm:%s190] %v199
                  %v201 = vld [vmem:[%s197 + $0x8] sm:%s190]
                  %202 = vst [vmem:[%s198 + $0x4] sm:%s190] %v201
                  %v203 = vld [vmem:[%s197 + $0x10] sm:%s190]
                  %204 = vst [vmem:[%s198 + $0x8] sm:%s190] %v203
                  %v205 = vld [vmem:[%s197 + $0x18] sm:%s190]
                  %206 = vst [vmem:[%s198 + $0xc] sm:%s190] %v205
                  %v207 = vld [vmem:[%s197 + $0x20] sm:%s190]
                  %208 = vst [vmem:[%s198 + $0x10] sm:%s190] %v207
                  %v209 = vld [vmem:[%s197 + $0x28] sm:%s190]
                  %210 = vst [vmem:[%s198 + $0x14] sm:%s190] %v209
                  %v211 = vld [vmem:[%s197 + $0x30] sm:%s190]
                  %212 = vst [vmem:[%s198 + $0x18] sm:%s190] %v211
                  %v213 = vld [vmem:[%s197 + $0x38] sm:%s190]
                  %214 = vst [vmem:[%s198 + $0x1c] sm:%s190] %v213
                  %v215 = vld [vmem:[%s197 + $0x40] sm:%s190]
                  %216 = vst [vmem:[%s198 + $0x20] sm:%s190] %v215
                  %v217 = vld [vmem:[%s197 + $0x48] sm:%s190]
                  %218 = vst [vmem:[%s198 + $0x24] sm:%s190] %v217
                  %v219 = vld [vmem:[%s197 + $0x50] sm:%s190]
                  %220 = vst [vmem:[%s198 + $0x28] sm:%s190] %v219
                  %v221 = vld [vmem:[%s197 + $0x58] sm:%s190]
                  %222 = vst [vmem:[%s198 + $0x2c] sm:%s190] %v221
                  %v223 = vld [vmem:[%s197 + $0x60] sm:%s190]
                  %224 = vst [vmem:[%s198 + $0x30] sm:%s190] %v223
                  %v225 = vld [vmem:[%s197 + $0x68] sm:%s190]
                  %226 = vst [vmem:[%s198 + $0x34] sm:%s190] %v225
                  %v227 = vld [vmem:[%s197 + $0x70] sm:%s190]
                  %228 = vst [vmem:[%s198 + $0x38] sm:%s190] %v227
                  %v229 = vld [vmem:[%s197 + $0x78] sm:%s190]
                  %230 = vst [vmem:[%s198 + $0x3c] sm:%s190] %v229
                $region55: #{tpu_custom_call.1} parent=42 // loop_footer
                  %s196 = sadd.s32 1, %s192
                $region56: #{tpu_custom_call.1} parent=42 // loop_footer_branch
                  %191 = sbr.rel target = $region52
                $region57: #{tpu_custom_call.1} parent=42 // loop_exit
                  _
              $region43: #{tpu_custom_call.1} parent=27 // pred_fallthru
                _
            $region28: #{tpu_custom_call.1} parent=23 // pred_fallthru
              _
            // Predicated region
            $region29: #{tpu_custom_call.1} parent=23 // pred_check
              _
            $region30: #{tpu_custom_call.1} parent=23 // pred_check_branch
              %136 = sbr.rel (0) target = $region32
            $region31: #{tpu_custom_call.1} parent=23 // pred_region
              %s138 = ssub.s32 16, 1
              loop: start=0, step=1, limit=1
              $region33: #{tpu_custom_call.1} parent=31 // loop_pre_header
                _
              $region34: #{tpu_custom_call.1} parent=31 // loop_header
                %s140 = sphi 0, %s144
                %p141 = scmp.ge.s32.totalorder %s140, 1
                %s145 = sphi %s130, %s130
                %s146 = sphi %s125, %s125
              $region35: #{tpu_custom_call.1} parent=31 // loop_header_branch
                %143 = sbr.rel (%p141) target = $region39
              $region36: #{tpu_custom_call.1} parent=31 // loop_body
                %v147 = vld [vmem:[%s145] sm:%s138]
                %148 = vst [vmem:[%s146] sm:%s138] %v147
                %v149 = vld [vmem:[%s145 + $0x8] sm:%s138]
                %150 = vst [vmem:[%s146 + $0x4] sm:%s138] %v149
                %v151 = vld [vmem:[%s145 + $0x10] sm:%s138]
                %152 = vst [vmem:[%s146 + $0x8] sm:%s138] %v151
                %v153 = vld [vmem:[%s145 + $0x18] sm:%s138]
                %154 = vst [vmem:[%s146 + $0xc] sm:%s138] %v153
                %v155 = vld [vmem:[%s145 + $0x20] sm:%s138]
                %156 = vst [vmem:[%s146 + $0x10] sm:%s138] %v155
                %v157 = vld [vmem:[%s145 + $0x28] sm:%s138]
                %158 = vst [vmem:[%s146 + $0x14] sm:%s138] %v157
                %v159 = vld [vmem:[%s145 + $0x30] sm:%s138]
                %160 = vst [vmem:[%s146 + $0x18] sm:%s138] %v159
                %v161 = vld [vmem:[%s145 + $0x38] sm:%s138]
                %162 = vst [vmem:[%s146 + $0x1c] sm:%s138] %v161
                %v163 = vld [vmem:[%s145 + $0x40] sm:%s138]
                %164 = vst [vmem:[%s146 + $0x20] sm:%s138] %v163
                %v165 = vld [vmem:[%s145 + $0x48] sm:%s138]
                %166 = vst [vmem:[%s146 + $0x24] sm:%s138] %v165
                %v167 = vld [vmem:[%s145 + $0x50] sm:%s138]
                %168 = vst [vmem:[%s146 + $0x28] sm:%s138] %v167
                %v169 = vld [vmem:[%s145 + $0x58] sm:%s138]
                %170 = vst [vmem:[%s146 + $0x2c] sm:%s138] %v169
                %v171 = vld [vmem:[%s145 + $0x60] sm:%s138]
                %172 = vst [vmem:[%s146 + $0x30] sm:%s138] %v171
                %v173 = vld [vmem:[%s145 + $0x68] sm:%s138]
                %174 = vst [vmem:[%s146 + $0x34] sm:%s138] %v173
                %v175 = vld [vmem:[%s145 + $0x70] sm:%s138]
                %176 = vst [vmem:[%s146 + $0x38] sm:%s138] %v175
                %v177 = vld [vmem:[%s145 + $0x78] sm:%s138]
                %178 = vst [vmem:[%s146 + $0x3c] sm:%s138] %v177
              $region37: #{tpu_custom_call.1} parent=31 // loop_footer
                %s144 = sadd.s32 1, %s140
              $region38: #{tpu_custom_call.1} parent=31 // loop_footer_branch
                %139 = sbr.rel target = $region34
              $region39: #{tpu_custom_call.1} parent=31 // loop_exit
                _
            $region32: #{tpu_custom_call.1} parent=23 // pred_fallthru
              _
          $region24: #{tpu_custom_call.1} parent=19 // pred_fallthru
            _
          %231 = vnop
        $region20: #{tpu_custom_call.1} parent=15 // pred_fallthru
          _
        // Predicated region
        $region58: #{tpu_custom_call.1} parent=15 // pred_check
          %p232 = pneg %p68
        $region59: #{tpu_custom_call.1} parent=15 // pred_check_branch
          %234 = sbr.rel (%p232) target = $region61
        $region60: #{tpu_custom_call.1} parent=15 // pred_region
          %s235 = smul.u32 16, %s16
          %p236 = scmp.lt.s32.totalorder %s235, 31
          %s237 = scalar_select %p236, %s235, 31
          %s238 = smul.addr %s237, 8
          %s239 = scalar_lea.vmem %s1, %s238
          %s240 = smul.u32 16, %s16
        $region61: #{tpu_custom_call.1} parent=15 // pred_fallthru
          _
      $region16: #{tpu_custom_call.1} parent=5 // pred_fallthru
        _
      %p241 = scmp.le.s32.totalorder 1, %s8
      %p242 = scmp.lt.s32.totalorder %s8, 5
      %p243 = pnand %p241, %p242
      %p244 = pneg %p243
      // Predicated region
      $region62: #{tpu_custom_call.1} parent=5 // pred_check
        _
      $region63: #{tpu_custom_call.1} parent=5 // pred_check_branch
        %246 = sbr.rel (%p243) target = $region65
      $region64: #{tpu_custom_call.1} parent=5 // pred_region
        %s247 = ssub.s32 %s8, 1
        %s248 = sand.u32 %s35, 1
        %s249 = sand.u32 %s35, 1
        %s250 = smul.addr %s249, 64
        %s251 = scalar_lea.vmem [#allocation2], %s250
        // Predicated region
        $region66: #{tpu_custom_call.1} parent=64 // pred_check
          %p252 = pneg %p48
        $region67: #{tpu_custom_call.1} parent=64 // pred_check_branch
          %254 = sbr.rel (%p252) target = $region69
        $region68: #{tpu_custom_call.1} parent=64 // pred_region
          _
        $region69: #{tpu_custom_call.1} parent=64 // pred_fallthru
          _
        %s255 = sand.u32 %s35, 1
        %s256 = sand.u32 %s35, 1
        %s257 = smul.addr %s256, 64
        %s258 = scalar_lea.vmem [#allocation2], %s257
        %p259 = pneg %p48
        %p260 = pneg %p45
        %s261 = smul.u32 16, %s18
        %p262 = scmp.lt.s32.totalorder %s261, 31
        %s263 = scalar_select %p262, %s261, 31
        %s264 = smul.addr %s263, 8
        %s265 = scalar_lea.vmem %s1, %s264
        %p266 = pneg %p74
        %p267 = pneg %p71
        %p268 = pneg %p100
        %p269 = pneg %p97
        %s270 = smul.u32 16, %s17
        %p271 = scmp.lt.s32.totalorder %s270, 31
        %s272 = scalar_select %p271, %s270, 31
        %s273 = smul.addr %s272, 8
        %s274 = scalar_lea.vmem %s2, %s273
        %s275 = smul.u32 16, %s17
        %s276 = smul.u32 16, %s18
        %p277 = scmp.lt.s32.totalorder %s276, 31
        %s278 = scalar_select %p277, %s276, 31
        %s279 = smul.addr %s278, 8
        %s280 = scalar_lea.vmem %s1, %s279
        %s281 = smul.u32 16, %s18
        %s282 = smul.u32 16, %s17
        %p283 = scmp.lt.s32.totalorder %s282, 31
        %s284 = scalar_select %p283, %s282, 31
        %s285 = smul.addr %s284, 8
        %s286 = scalar_lea.vmem %s2, %s285
        %s287 = smul.u32 16, %s17
        %p288 = scmp.eq.s32.totalorder %s18, 0
        // Predicated region
        $region70: #{tpu_custom_call.1} parent=64 // pred_check
          %p289 = pneg %p288
        $region71: #{tpu_custom_call.1} parent=64 // pred_check_branch
          %291 = sbr.rel (%p289) target = $region73
        $region72: #{tpu_custom_call.1} parent=64 // pred_region
          %vm292 = vcmask 130048
          %293 = vst.msk [vmem:[%s286] sm:$0xff] %vm292, 0.0
          %294 = vst.msk [vmem:[%s286 + $0x8] sm:$0xff] %vm292, 0.0
          %295 = vst.msk [vmem:[%s286 + $0x10] sm:$0xff] %vm292, 0.0
          %296 = vst.msk [vmem:[%s286 + $0x18] sm:$0xff] %vm292, 0.0
          %297 = vst.msk [vmem:[%s286 + $0x20] sm:$0xff] %vm292, 0.0
          %298 = vst.msk [vmem:[%s286 + $0x28] sm:$0xff] %vm292, 0.0
          %299 = vst.msk [vmem:[%s286 + $0x30] sm:$0xff] %vm292, 0.0
          %300 = vst.msk [vmem:[%s286 + $0x38] sm:$0xff] %vm292, 0.0
          %301 = vst.msk [vmem:[%s286 + $0x40] sm:$0xff] %vm292, 0.0
          %302 = vst.msk [vmem:[%s286 + $0x48] sm:$0xff] %vm292, 0.0
          %303 = vst.msk [vmem:[%s286 + $0x50] sm:$0xff] %vm292, 0.0
          %304 = vst.msk [vmem:[%s286 + $0x58] sm:$0xff] %vm292, 0.0
          %305 = vst.msk [vmem:[%s286 + $0x60] sm:$0xff] %vm292, 0.0
          %306 = vst.msk [vmem:[%s286 + $0x68] sm:$0xff] %vm292, 0.0
          %307 = vst.msk [vmem:[%s286 + $0x70] sm:$0xff] %vm292, 0.0
          %308 = vst.msk [vmem:[%s286 + $0x78] sm:$0xff] %vm292, 0.0
        $region73: #{tpu_custom_call.1} parent=64 // pred_fallthru
          _
        %v309 = vld [vmem:[%s286] sm:$0xff]
        %v310 = vld [vmem:[%s286 + $0x8] sm:$0xff]
        %v311 = vld [vmem:[%s286 + $0x10] sm:$0xff]
        %v312 = vld [vmem:[%s286 + $0x18] sm:$0xff]
        %v313 = vld [vmem:[%s286 + $0x20] sm:$0xff]
        %v314 = vld [vmem:[%s286 + $0x28] sm:$0xff]
        %v315 = vld [vmem:[%s286 + $0x30] sm:$0xff]
        %v316 = vld [vmem:[%s286 + $0x38] sm:$0xff]
        %v317 = vld [vmem:[%s286 + $0x40] sm:$0xff]
        %v318 = vld [vmem:[%s286 + $0x48] sm:$0xff]
        %v319 = vld [vmem:[%s286 + $0x50] sm:$0xff]
        %v320 = vld [vmem:[%s286 + $0x58] sm:$0xff]
        %v321 = vld [vmem:[%s286 + $0x60] sm:$0xff]
        %v322 = vld [vmem:[%s286 + $0x68] sm:$0xff]
        %v323 = vld [vmem:[%s286 + $0x70] sm:$0xff]
        %v324 = vld [vmem:[%s286 + $0x78] sm:$0xff]
        %v325 = vld [vmem:[%s251] sm:$0xf]
        %v326 = vld [vmem:[%s251 + $0x4] sm:$0xf]
        %v327 = vld [vmem:[%s251 + $0x8] sm:$0xf]
        %v328 = vld [vmem:[%s251 + $0xc] sm:$0xf]
        %v329 = vld [vmem:[%s251 + $0x10] sm:$0xf]
        %v330 = vld [vmem:[%s251 + $0x14] sm:$0xf]
        %v331 = vld [vmem:[%s251 + $0x18] sm:$0xf]
        %v332 = vld [vmem:[%s251 + $0x1c] sm:$0xf]
        %v333 = vld [vmem:[%s251 + $0x20] sm:$0xf]
        %v334 = vld [vmem:[%s251 + $0x24] sm:$0xf]
        %v335 = vld [vmem:[%s251 + $0x28] sm:$0xf]
        %v336 = vld [vmem:[%s251 + $0x2c] sm:$0xf]
        %v337 = vld [vmem:[%s251 + $0x30] sm:$0xf]
        %v338 = vld [vmem:[%s251 + $0x34] sm:$0xf]
        %v339 = vld [vmem:[%s251 + $0x38] sm:$0xf]
        %v340 = vld [vmem:[%s251 + $0x3c] sm:$0xf]
        %v341 = vld [vmem:[%s280] sm:$0xff]
        %v342 = vld [vmem:[%s280 + $0x8] sm:$0xff]
        %v343 = vld [vmem:[%s280 + $0x10] sm:$0xff]
        %v344 = vld [vmem:[%s280 + $0x18] sm:$0xff]
        %v345 = vld [vmem:[%s280 + $0x20] sm:$0xff]
        %v346 = vld [vmem:[%s280 + $0x28] sm:$0xff]
        %v347 = vld [vmem:[%s280 + $0x30] sm:$0xff]
        %v348 = vld [vmem:[%s280 + $0x38] sm:$0xff]
        %v349 = vld [vmem:[%s280 + $0x40] sm:$0xff]
        %v350 = vld [vmem:[%s280 + $0x48] sm:$0xff]
        %v351 = vld [vmem:[%s280 + $0x50] sm:$0xff]
        %v352 = vld [vmem:[%s280 + $0x58] sm:$0xff]
        %v353 = vld [vmem:[%s280 + $0x60] sm:$0xff]
        %v354 = vld [vmem:[%s280 + $0x68] sm:$0xff]
        %v355 = vld [vmem:[%s280 + $0x70] sm:$0xff]
        %v356 = vld [vmem:[%s280 + $0x78] sm:$0xff]
        %v357 = vpack.c.bf16 %v342, %v341
        %v358 = vpack.c.bf16 %v344, %v343
        %v359 = vpack.c.bf16 %v346, %v345
        %v360 = vpack.c.bf16 %v348, %v347
        %v361 = vpack.c.bf16 %v350, %v349
        %v362 = vpack.c.bf16 %v352, %v351
        %v363 = vpack.c.bf16 %v354, %v353
        %v364 = vpack.c.bf16 %v356, %v355
        %v381 = vunpack.c.l.b16 %v325
        %v382 = vunpack.c.l.b16 %v326
        %v383 = vunpack.c.l.b16 %v327
        %v384 = vunpack.c.l.b16 %v328
        %v385 = vunpack.c.l.b16 %v329
        %v386 = vunpack.c.l.b16 %v330
        %v387 = vunpack.c.l.b16 %v331
        %v388 = vunpack.c.l.b16 %v332
        %v389 = vunpack.c.l.b16 %v333
        %v390 = vunpack.c.l.b16 %v334
        %v391 = vunpack.c.l.b16 %v335
        %v392 = vunpack.c.l.b16 %v336
        %v393 = vunpack.c.l.b16 %v337
        %v394 = vunpack.c.l.b16 %v338
        %v395 = vunpack.c.l.b16 %v339
        %v396 = vunpack.c.l.b16 %v340
        %v397 = vpack.c.b16 %v382, %v381
        %v398 = vpack.c.b16 %v384, %v383
        %v399 = vpack.c.b16 %v386, %v385
        %v400 = vpack.c.b16 %v388, %v387
        %v401 = vpack.c.b16 %v390, %v389
        %v402 = vpack.c.b16 %v392, %v391
        %v403 = vpack.c.b16 %v394, %v393
        %v404 = vpack.c.b16 %v396, %v395
        %413 = vmatpush.bf16.msra.mxu0 %v364
        %414 = vmatpush.bf16.msra.mxu0 %v363
        %415 = vmatpush.bf16.msra.mxu0 %v362
        %416 = vmatpush.bf16.msra.mxu0 %v361
        %417 = vmatpush.bf16.msra.mxu0 %v360
        %418 = vmatpush.bf16.msra.mxu0 %v359
        %419 = vmatpush.bf16.msra.mxu0 %v358
        %420 = vmatpush.bf16.msra.mxu0 %v357
        %421 = vmatmul.bf16.gmra.mxu0 %v397
        %v422 = vpop.f32.mrf.mxu0
        %v423 = vadd.f32 0.0, %v422
        %v424 = vpop.f32.mrf.mxu0
        %v425 = vadd.f32 0.0, %v424
        %426 = vmatmul.bf16.gmra.mxu0 %v398
        %v427 = vpop.f32.mrf.mxu0
        %v428 = vadd.f32 0.0, %v427
        %v429 = vpop.f32.mrf.mxu0
        %v430 = vadd.f32 0.0, %v429
        %431 = vmatmul.bf16.gmra.mxu0 %v399
        %v432 = vpop.f32.mrf.mxu0
        %v433 = vadd.f32 0.0, %v432
        %v434 = vpop.f32.mrf.mxu0
        %v435 = vadd.f32 0.0, %v434
        %436 = vmatmul.bf16.gmra.mxu0 %v400
        %v437 = vpop.f32.mrf.mxu0
        %v438 = vadd.f32 0.0, %v437
        %v439 = vpop.f32.mrf.mxu0
        %v440 = vadd.f32 0.0, %v439
        %441 = vmatmul.bf16.gmra.mxu0 %v401
        %v442 = vpop.f32.mrf.mxu0
        %v443 = vadd.f32 0.0, %v442
        %v444 = vpop.f32.mrf.mxu0
        %v445 = vadd.f32 0.0, %v444
        %446 = vmatmul.bf16.gmra.mxu0 %v402
        %v447 = vpop.f32.mrf.mxu0
        %v448 = vadd.f32 0.0, %v447
        %v449 = vpop.f32.mrf.mxu0
        %v450 = vadd.f32 0.0, %v449
        %451 = vmatmul.bf16.gmra.mxu0 %v403
        %v452 = vpop.f32.mrf.mxu0
        %v453 = vadd.f32 0.0, %v452
        %v454 = vpop.f32.mrf.mxu0
        %v455 = vadd.f32 0.0, %v454
        %456 = vmatmul.bf16.gmra.mxu0 %v404
        %v457 = vpop.f32.mrf.mxu0
        %v458 = vadd.f32 0.0, %v457
        %v459 = vpop.f32.mrf.mxu0
        %v460 = vadd.f32 0.0, %v459
        %461 = vdwg.mxu0
        %v462 = vadd.f32 %v309, %v423
        %v463 = vadd.f32 %v310, %v425
        %v464 = vadd.f32 %v311, %v428
        %v465 = vadd.f32 %v312, %v430
        %v466 = vadd.f32 %v313, %v433
        %v467 = vadd.f32 %v314, %v435
        %v468 = vadd.f32 %v315, %v438
        %v469 = vadd.f32 %v316, %v440
        %v470 = vadd.f32 %v317, %v443
        %v471 = vadd.f32 %v318, %v445
        %v472 = vadd.f32 %v319, %v448
        %v473 = vadd.f32 %v320, %v450
        %v474 = vadd.f32 %v321, %v453
        %v475 = vadd.f32 %v322, %v455
        %v476 = vadd.f32 %v323, %v458
        %v477 = vadd.f32 %v324, %v460
        %vm478 = vcmask 130048
        %479 = vst.msk [vmem:[%s286] sm:$0xff] %vm478, %v462
        %480 = vst.msk [vmem:[%s286 + $0x8] sm:$0xff] %vm478, %v463
        %481 = vst.msk [vmem:[%s286 + $0x10] sm:$0xff] %vm478, %v464
        %482 = vst.msk [vmem:[%s286 + $0x18] sm:$0xff] %vm478, %v465
        %483 = vst.msk [vmem:[%s286 + $0x20] sm:$0xff] %vm478, %v466
        %484 = vst.msk [vmem:[%s286 + $0x28] sm:$0xff] %vm478, %v467
        %485 = vst.msk [vmem:[%s286 + $0x30] sm:$0xff] %vm478, %v468
        %486 = vst.msk [vmem:[%s286 + $0x38] sm:$0xff] %vm478, %v469
        %487 = vst.msk [vmem:[%s286 + $0x40] sm:$0xff] %vm478, %v470
        %488 = vst.msk [vmem:[%s286 + $0x48] sm:$0xff] %vm478, %v471
        %489 = vst.msk [vmem:[%s286 + $0x50] sm:$0xff] %vm478, %v472
        %490 = vst.msk [vmem:[%s286 + $0x58] sm:$0xff] %vm478, %v473
        %491 = vst.msk [vmem:[%s286 + $0x60] sm:$0xff] %vm478, %v474
        %492 = vst.msk [vmem:[%s286 + $0x68] sm:$0xff] %vm478, %v475
        %493 = vst.msk [vmem:[%s286 + $0x70] sm:$0xff] %vm478, %v476
        %494 = vst.msk [vmem:[%s286 + $0x78] sm:$0xff] %vm478, %v477
        %s495 = smul.u32 16, %s17
        %p496 = scmp.lt.s32.totalorder %s495, 31
        %s497 = scalar_select %p496, %s495, 31
        %s498 = smul.addr %s497, 8
        %s499 = scalar_lea.vmem %s2, %s498
        // Predicated region
        $region74: #{tpu_custom_call.1} parent=64 // pred_check
          %p500 = pneg %p97
        $region75: #{tpu_custom_call.1} parent=64 // pred_check_branch
          %502 = sbr.rel (%p500) target = $region77
        $region76: #{tpu_custom_call.1} parent=64 // pred_region
          %s503 = smul.u32 16, %s17
        $region77: #{tpu_custom_call.1} parent=64 // pred_fallthru
          _
      $region65: #{tpu_custom_call.1} parent=5 // pred_fallthru
        _
      %p504 = scmp.le.s32.totalorder 2, %s8
      // Predicated region
      $region78: #{tpu_custom_call.1} parent=5 // pred_check
        %p505 = pneg %p504
      $region79: #{tpu_custom_call.1} parent=5 // pred_check_branch
        %507 = sbr.rel (%p505) target = $region81
      $region80: #{tpu_custom_call.1} parent=5 // pred_region
        %s508 = ssub.s32 %s8, 2
        // Predicated region
        $region82: #{tpu_custom_call.1} parent=80 // pred_check
          %p509 = pneg %p103
        $region83: #{tpu_custom_call.1} parent=80 // pred_check_branch
          %511 = sbr.rel (%p509) target = $region85
        $region84: #{tpu_custom_call.1} parent=80 // pred_region
          %s512 = smul.u32 16, %s19
          %p513 = scmp.lt.s32.totalorder %s512, 31
          %s514 = scalar_select %p513, %s512, 31
          %s515 = smul.addr %s514, 8
          %s516 = scalar_lea.vmem %s2, %s515
        $region85: #{tpu_custom_call.1} parent=80 // pred_fallthru
          _
      $region81: #{tpu_custom_call.1} parent=5 // pred_fallthru
        _
    $region6: #{tpu_custom_call.1} parent=1 // loop_footer
      %s12 = sadd.s32 1, %s8
    $region7: #{tpu_custom_call.1} parent=1 // loop_footer_branch
      %7 = sbr.rel target = $region3
    $region8: #{tpu_custom_call.1} parent=1 // loop_exit
      _

</llo_original>
